<compile_context>
chip_gen: v7x
topology: tpu7x:2x2x1
jax: 0.10.0
libtpu: 0.0.40
codegen_flags: <defaults>
</compile_context>

<pallas_src>
import jax
import jax.numpy as jnp
from jax import lax
from jax.experimental import pallas as pl
from jax.experimental.pallas import tpu as pltpu


def _round_up(n, m):
    return ((n + m - 1) // m) * m


def _cdiv(n, m):
    return (n + m - 1) // m


def _make_dnn_kernel(n_layers, feature_major_output):
    """Fused MLP kernel.

    refs = (x, w0T, b0, w1T, b1, ..., out)
      x:    (tile_b, inputs_dim)  batch-major input tile (contiguous DMA)
      wiT:  (out_i, in_i)         VMEM-resident weight (torch layout)
      bi:   (out_i, 1) float32    VMEM-resident bias
      out:  (tile_b, out_last)    batch-major   (default), or
            (out_last, tile_b)    feature-major (feature_major_output=True)
    """

    def kernel(*refs):
        x_ref = refs[0]
        o_ref = refs[-1]
        p_refs = refs[1:-1]

        x = x_ref[...]                               # (tile_b, in_dim)
        h = None                                     # feature-major (f_i, tile_b)
        for i in range(n_layers):
            w = p_refs[2 * i][...]                   # (out_i, in_i)
            b = p_refs[2 * i + 1][...]               # (out_i, 1), f32
            if i == 0:
                # w @ x^T: contract w's in-dim with x's feature dim (both axis 1).
                rhs = x if x.dtype == w.dtype else x.astype(w.dtype)
                dnums = (((1,), (1,)), ((), ()))
            else:
                # w @ h: plain matmul on the feature-major activation.
                rhs = h if h.dtype == w.dtype else h.astype(w.dtype)
                dnums = (((1,), (0,)), ((), ()))
            acc = lax.dot_general(w, rhs, dnums,
                                  preferred_element_type=jnp.float32)
            # Bias add + ReLU on the f32 accumulator (VPU, lane-broadcast bias).
            h = jnp.maximum(acc + b, 0.0)            # (out_i, tile_b)
            # dropout_rate = 0 -> identity at inference; use_bn=False.

        if feature_major_output:
            o_ref[...] = h.astype(o_ref.dtype)       # lane-dense store (v5e)
        else:
            o_ref[...] = h.T.astype(o_ref.dtype)     # in-kernel XLU transpose

    return kernel


def dnn_forward(x, weights, biases, *, tile_b_cap=4096, out_dtype=None,
                feature_major_output=False,
                vmem_limit_bytes=32 * 1024 * 1024):
    """DNN forward (Linear + bias + ReLU per layer) as one fused Pallas call.

    x:       (batch, inputs_dim)
    weights: list of (in_i, out_i) arrays  (= torch_weight.T); pass bf16 on
             v6e/v7x (with bf16 x) to halve streamed bytes.
    biases:  list of (out_i,) or (1, out_i) arrays
    returns: (batch, out_last), or (out_last, batch) if feature_major_output.
    """
    n_layers = len(weights)
    assert len(biases) == n_layers and n_layers > 0
    batch, inputs_dim = x.shape
    out_dim = weights[-1].shape[1]
    out_dtype = out_dtype or x.dtype

    # Feature-major parameters: W_i^T (out_i, in_i); biases pre-cast to f32
    # (the kernel adds them to the f32 accumulator -- no per-layer casts).
    params = []
    for w, b in zip(weights, biases):
        params.append(jnp.asarray(w).T)
        params.append(jnp.asarray(b).reshape(-1, 1).astype(jnp.float32))

    # Adaptive batch tile: multiple of 128 (lane-dense), >=2 grid steps when
    # possible (v7x megacore), capped at tile_b_cap, never larger than batch.
    tile_b = max(128, min(tile_b_cap, _round_up(_cdiv(batch, 2), 128)))
    if tile_b >= batch:
        tile_b = batch                       # single block == full array dim
    grid = (_cdiv(batch, tile_b),)           # partial last tile handled by Pallas

    x_spec = pl.BlockSpec((tile_b, inputs_dim), lambda i: (i, 0))
    # Constant index_map -> weights/biases are DMA'd into VMEM once and stay
    # resident across all grid steps.
    param_specs = [pl.BlockSpec(p.shape, lambda i: (0, 0)) for p in params]

    if feature_major_output:
        out_shape = jax.ShapeDtypeStruct((out_dim, batch), out_dtype)
        out_spec = pl.BlockSpec((out_dim, tile_b), lambda i: (0, i))
    else:
        out_shape = jax.ShapeDtypeStruct((batch, out_dim), out_dtype)
        out_spec = pl.BlockSpec((tile_b, out_dim), lambda i: (i, 0))

    return pl.pallas_call(
        _make_dnn_kernel(n_layers, feature_major_output),
        out_shape=out_shape,
        grid=grid,
        in_specs=[x_spec] + param_specs,
        out_specs=out_spec,
        compiler_params=pltpu.CompilerParams(
            dimension_semantics=("parallel",),   # megacore shard on v7x
            vmem_limit_bytes=vmem_limit_bytes,
        ),
    )(x, *params)


def init_dnn_params(key, inputs_dim, hidden_units, init_std=1e-4):
    """Parameter init matching the torch module.

    Weights ~ Normal(0, init_std) (explicit init in the module); biases follow
    torch nn.Linear default Uniform(-1/sqrt(fan_in), +1/sqrt(fan_in)).
    Weights are stored as (in, out) = torch_weight.T.
    """
    dims = [inputs_dim] + list(hidden_units)
    weights, biases = [], []
    for i in range(len(dims) - 1):
        key, kw, kb = jax.random.split(key, 3)
        fan_in, fan_out = dims[i], dims[i + 1]
        w = init_std * jax.random.normal(kw, (fan_in, fan_out), dtype=jnp.float32)
        bound = 1.0 / (fan_in ** 0.5)
        b = jax.random.uniform(
            kb, (1, fan_out), dtype=jnp.float32, minval=-bound, maxval=bound
        )
        weights.append(w)
        biases.append(b)
    return weights, biases


def dnn_reference(x, weights, biases):
    """Pure-JAX reference of the torch forward (relu, no bn, no dropout)."""
    h = x
    for w, b in zip(weights, biases):
        h = jnp.maximum(h @ w + b, 0.0)
    return h


if __name__ == "__main__":
    inputs_dim = 16
    hidden_units = (16, 64, 32)
    batch = 300   # -> tile_b=256, grid=2 (exercises megacore split + a partial
                  #    boundary tile with no wrapper-side padding)

    key = jax.random.PRNGKey(0)
    key, kx = jax.random.split(key)
    x = jax.random.normal(kx, (batch, inputs_dim), dtype=jnp.float32)

    weights, biases = init_dnn_params(key, inputs_dim, hidden_units)
    ref = dnn_reference(x, weights, biases)

    # Default: batch-major output, no post-kernel transpose pass.
    out = dnn_forward(x, weights, biases)
    out = jax.block_until_ready(out)
    assert out.shape == (batch, hidden_units[-1])
    assert jnp.allclose(out, ref, atol=1e-4, rtol=1e-4), "mismatch vs reference"

    # v5e-preferred variant: lane-dense feature-major store, consumer handles
    # layout.
    out_fm = dnn_forward(x, weights, biases, feature_major_output=True)
    out_fm = jax.block_until_ready(out_fm)
    assert out_fm.shape == (hidden_units[-1], batch)
    assert jnp.allclose(out_fm.T, ref, atol=1e-4, rtol=1e-4), "fm mismatch"

    print("KERNEL_OK")
</pallas_src>

<mosaic_0001>
module attributes {stable_mosaic.version = 11 : i64} {
  func.func @kernel(%arg0: i32, %arg1: memref<256x16xf32, #tpu.memory_space<vmem>>, %arg2: memref<16x16xf32, #tpu.memory_space<vmem>>, %arg3: memref<16x1xf32, #tpu.memory_space<vmem>>, %arg4: memref<64x16xf32, #tpu.memory_space<vmem>>, %arg5: memref<64x1xf32, #tpu.memory_space<vmem>>, %arg6: memref<32x64xf32, #tpu.memory_space<vmem>>, %arg7: memref<32x1xf32, #tpu.memory_space<vmem>>, %arg8: memref<256x32xf32, #tpu.memory_space<vmem>>) attributes {dimension_semantics = [#tpu.dimension_semantics<parallel>], iteration_bounds = array<i64: 2>, scalar_prefetch = 0 : i64, scratch_operands = 0 : i64, tpu.core_type = #tpu.core_type<tc>, window_params = [{transform_indices = @transform_0, window_bounds = array<i64: 256, 16>}, {pipeline_mode = #tpu.pipeline_mode<synchronous>, transform_indices = @transform_1, window_bounds = array<i64: 16, 16>}, {pipeline_mode = #tpu.pipeline_mode<synchronous>, transform_indices = @transform_2, window_bounds = array<i64: 16, 1>}, {pipeline_mode = #tpu.pipeline_mode<synchronous>, transform_indices = @transform_3, window_bounds = array<i64: 64, 16>}, {pipeline_mode = #tpu.pipeline_mode<synchronous>, transform_indices = @transform_4, window_bounds = array<i64: 64, 1>}, {pipeline_mode = #tpu.pipeline_mode<synchronous>, transform_indices = @transform_5, window_bounds = array<i64: 32, 64>}, {pipeline_mode = #tpu.pipeline_mode<synchronous>, transform_indices = @transform_6, window_bounds = array<i64: 32, 1>}, {transform_indices = @transform_7, window_bounds = array<i64: 256, 32>}]} {
    %c0 = arith.constant 0 : index
    %c0_0 = arith.constant 0 : index
    %0 = vector.load %arg1[%c0, %c0_0] : memref<256x16xf32, #tpu.memory_space<vmem>>, vector<256x16xf32>
    %c0_1 = arith.constant 0 : index
    %c0_2 = arith.constant 0 : index
    %1 = vector.load %arg2[%c0_1, %c0_2] : memref<16x16xf32, #tpu.memory_space<vmem>>, vector<16x16xf32>
    %c0_3 = arith.constant 0 : index
    %c0_4 = arith.constant 0 : index
    %2 = vector.load %arg3[%c0_3, %c0_4] : memref<16x1xf32, #tpu.memory_space<vmem>>, vector<16x1xf32>
    %cst = arith.constant dense<0.000000e+00> : vector<16x256xf32>
    %3 = tpu.matmul %1, %0, %cst {dimension_numbers = #tpu.dot_dimension_numbers<[1], [1], [0], [0], [0, 0, 1, 0], [], []>} : vector<16x16xf32>, vector<256x16xf32>, vector<16x256xf32> -> vector<16x256xf32>
    %4 = vector.broadcast %2 : vector<16x1xf32> to vector<16x256xf32>
    %5 = arith.addf %3, %4 : vector<16x256xf32>
    %cst_5 = arith.constant 0.000000e+00 : f32
    %6 = vector.broadcast %cst_5 : f32 to vector<16x256xf32>
    %7 = arith.maximumf %5, %6 : vector<16x256xf32>
    %c0_6 = arith.constant 0 : index
    %c0_7 = arith.constant 0 : index
    %8 = vector.load %arg4[%c0_6, %c0_7] : memref<64x16xf32, #tpu.memory_space<vmem>>, vector<64x16xf32>
    %c0_8 = arith.constant 0 : index
    %c0_9 = arith.constant 0 : index
    %9 = vector.load %arg5[%c0_8, %c0_9] : memref<64x1xf32, #tpu.memory_space<vmem>>, vector<64x1xf32>
    %cst_10 = arith.constant dense<0.000000e+00> : vector<64x256xf32>
    %10 = tpu.matmul %8, %7, %cst_10 {dimension_numbers = #tpu.dot_dimension_numbers<[1], [0], [0], [1], [0, 0, 1, 1], [], []>} : vector<64x16xf32>, vector<16x256xf32>, vector<64x256xf32> -> vector<64x256xf32>
    %11 = vector.broadcast %9 : vector<64x1xf32> to vector<64x256xf32>
    %12 = arith.addf %10, %11 : vector<64x256xf32>
    %cst_11 = arith.constant 0.000000e+00 : f32
    %13 = vector.broadcast %cst_11 : f32 to vector<64x256xf32>
    %14 = arith.maximumf %12, %13 : vector<64x256xf32>
    %c0_12 = arith.constant 0 : index
    %c0_13 = arith.constant 0 : index
    %15 = vector.load %arg6[%c0_12, %c0_13] : memref<32x64xf32, #tpu.memory_space<vmem>>, vector<32x64xf32>
    %c0_14 = arith.constant 0 : index
    %c0_15 = arith.constant 0 : index
    %16 = vector.load %arg7[%c0_14, %c0_15] : memref<32x1xf32, #tpu.memory_space<vmem>>, vector<32x1xf32>
    %cst_16 = arith.constant dense<0.000000e+00> : vector<32x256xf32>
    %17 = tpu.matmul %15, %14, %cst_16 {dimension_numbers = #tpu.dot_dimension_numbers<[1], [0], [0], [1], [0, 0, 1, 1], [], []>} : vector<32x64xf32>, vector<64x256xf32>, vector<32x256xf32> -> vector<32x256xf32>
    %18 = vector.broadcast %16 : vector<32x1xf32> to vector<32x256xf32>
    %19 = arith.addf %17, %18 : vector<32x256xf32>
    %cst_17 = arith.constant 0.000000e+00 : f32
    %20 = vector.broadcast %cst_17 : f32 to vector<32x256xf32>
    %21 = arith.maximumf %19, %20 : vector<32x256xf32>
    %22 = tpu.transpose %21, [1, 0] : vector<32x256xf32> -> vector<256x32xf32>
    %c0_18 = arith.constant 0 : index
    %c0_19 = arith.constant 0 : index
    %23 = vector.load %arg8[%c0_18, %c0_19] : memref<256x32xf32, #tpu.memory_space<vmem>>, vector<256x32xf32>
    tpu.vector_store %arg8[%c0_18, %c0_19], %22 {strides = array<i32>} : memref<256x32xf32, #tpu.memory_space<vmem>>, vector<256x32xf32>,
    return
  }
  func.func @transform_0(%arg0: i32) -> (i32, i32) {
    %c0_i32 = arith.constant 0 : i32
    %c0_i32_0 = arith.constant 0 : i32
    return %arg0, %c0_i32 : i32, i32
  }
  func.func @transform_1(%arg0: i32) -> (i32, i32) {
    %c0_i32 = arith.constant 0 : i32
    %c0_i32_0 = arith.constant 0 : i32
    %c0_i32_1 = arith.constant 0 : i32
    return %c0_i32, %c0_i32_0 : i32, i32
  }
  func.func @transform_2(%arg0: i32) -> (i32, i32) {
    %c0_i32 = arith.constant 0 : i32
    %c0_i32_0 = arith.constant 0 : i32
    %c0_i32_1 = arith.constant 0 : i32
    return %c0_i32, %c0_i32_0 : i32, i32
  }
  func.func @transform_3(%arg0: i32) -> (i32, i32) {
    %c0_i32 = arith.constant 0 : i32
    %c0_i32_0 = arith.constant 0 : i32
    %c0_i32_1 = arith.constant 0 : i32
    return %c0_i32, %c0_i32_0 : i32, i32
  }
  func.func @transform_4(%arg0: i32) -> (i32, i32) {
    %c0_i32 = arith.constant 0 : i32
    %c0_i32_0 = arith.constant 0 : i32
    %c0_i32_1 = arith.constant 0 : i32
    return %c0_i32, %c0_i32_0 : i32, i32
  }
  func.func @transform_5(%arg0: i32) -> (i32, i32) {
    %c0_i32 = arith.constant 0 : i32
    %c0_i32_0 = arith.constant 0 : i32
    %c0_i32_1 = arith.constant 0 : i32
    return %c0_i32, %c0_i32_0 : i32, i32
  }
  func.func @transform_6(%arg0: i32) -> (i32, i32) {
    %c0_i32 = arith.constant 0 : i32
    %c0_i32_0 = arith.constant 0 : i32
    %c0_i32_1 = arith.constant 0 : i32
    return %c0_i32, %c0_i32_0 : i32, i32
  }
  func.func @transform_7(%arg0: i32) -> (i32, i32) {
    %c0_i32 = arith.constant 0 : i32
    %c0_i32_0 = arith.constant 0 : i32
    return %arg0, %c0_i32 : i32, i32
  }
}

</mosaic_0001>

<llo_original>
// kernel: tpu_custom_call.1
$region0: #{tpu_custom_call.1}
  #allocation0 [shape = 'u32[]', space=smem, size = 0x4, offset = 0x4, fixed_abs, tag = 'smem constant byte address 0x4 - core index']
  #allocation1 [shape = 'u32[144,128]{1,0:T(1,128)}', space=vmem, size = 0x12000, scoped, tag = 'internal scratch']
  %s0 = inlined_call_operand.vmem [shape: f32[300,16], index: 0, kind: input, shape index: {}]
  %s1 = inlined_call_operand.vmem [shape: f32[16,16], index: 1, kind: input, shape index: {}]
  %s2 = inlined_call_operand.vmem [shape: f32[16,1], index: 2, kind: input, shape index: {}]
  %s3 = inlined_call_operand.vmem [shape: f32[64,16], index: 3, kind: input, shape index: {}]
  %s4 = inlined_call_operand.vmem [shape: f32[64,1], index: 4, kind: input, shape index: {}]
  %s5 = inlined_call_operand.vmem [shape: f32[32,64], index: 5, kind: input, shape index: {}]
  %s6 = inlined_call_operand.vmem [shape: f32[32,1], index: 6, kind: input, shape index: {}]
  %s7 = inlined_call_operand.vmem [shape: f32[300,32], index: 7, kind: output, shape index: {}]
  %s8 = sld [smem:[#allocation0]]
  $region109: #{tpu_custom_call.1} parent=0
    _
  %s10 = ssub.s32 1, %s8
  %s11 = scalar_select 0, %s10, %s8
  $region1: #{tpu_custom_call.1} parent=0
    #allocation2 [shape = 'u8[262144]{0}', space=vmem, size = 0x40000, scoped, tag = 'output window, operand 0']
    loop: start=0, step=1, limit=4
    $region2: #{tpu_custom_call.1} parent=1 // loop_pre_header
      _
    $region3: #{tpu_custom_call.1} parent=1 // loop_header
      %s13 = sphi 0, %s17
      %p14 = scmp.ge.s32.totalorder %s13, 4
      %s23 = sphi 0, %s25
      %s26 = sphi 0, %s23
      %s27 = sphi 0, %s26
      %s43 = sphi 0, %s27
      %s47 = sphi 0, %s47
      %s49 = sphi 0, %s47
      %s50 = sphi 0, %s49
      %s64 = sphi 0, %s50
      %s68 = sphi 0, %s68
      %s70 = sphi 0, %s68
      %s71 = sphi 0, %s70
      %s85 = sphi 0, %s71
      %s89 = sphi 0, %s89
      %s91 = sphi 0, %s89
      %s92 = sphi 0, %s91
      %s106 = sphi 0, %s92
      %s110 = sphi 0, %s110
      %s112 = sphi 0, %s110
      %s113 = sphi 0, %s112
      %s127 = sphi 0, %s113
      %s131 = sphi 0, %s131
      %s133 = sphi 0, %s131
      %s134 = sphi 0, %s133
      %s148 = sphi 0, %s134
      %s152 = sphi 0, %s152
      %s154 = sphi 0, %s152
      %s155 = sphi 0, %s154
      %s169 = sphi 0, %s155
      %s175 = sphi 0, %s177
      %s178 = sphi 0, %s175
      %s179 = sphi 0, %s178
      %s195 = sphi 0, %s179
    $region4: #{tpu_custom_call.1} parent=1 // loop_header_branch
      %16 = sbr.rel (%p14) target = $region8
    $region5: #{tpu_custom_call.1} parent=1 // loop_body
      %s18 = ssub.s32 %s13, 1
      %s19 = ssub.s32 %s13, 2
      %s20 = sadd.s32 %s13, 1
      %s21 = ssub.s32 %s13, %s20
      %p22 = scmp.eq.s32.totalorder %s21, 0
      %s24 = sadd.s32 %s23, 1
      %s25 = scalar_select %p22, %s23, %s24
      %p28 = pneg %p22
      %p29 = scmp.eq.s32.totalorder %s13, 1
      %p30 = por %p28, %p29
      %p31 = scmp.ne.s32.totalorder %s23, %s26
      %p32 = scmp.eq.s32.totalorder %s13, 0
      %p33 = por %p31, %p32
      %p34 = scmp.ne.s32.totalorder %s23, %s26
      %p35 = scmp.eq.s32.totalorder %s18, 1
      %p36 = por %p34, %p35
      %p37 = scmp.ne.s32.totalorder %s26, %s27
      %p38 = scmp.eq.s32.totalorder %s18, 0
      %p39 = por %p37, %p38
      %p40 = scmp.ne.s32.totalorder %s26, %s27
      %p41 = scmp.eq.s32.totalorder %s19, 1
      %p42 = por %p40, %p41
      %p44 = scmp.ne.s32.totalorder %s27, %s43
      %p45 = scmp.eq.s32.totalorder %s19, 0
      %p46 = por %p44, %p45
      %s48 = sadd.s32 %s47, 1
      %p51 = scmp.eq.s32.totalorder %s13, 1
      %p52 = scmp.ne.s32.totalorder %s47, %s49
      %p53 = scmp.eq.s32.totalorder %s13, 0
      %p54 = por %p52, %p53
      %p55 = scmp.ne.s32.totalorder %s47, %s49
      %p56 = scmp.eq.s32.totalorder %s18, 1
      %p57 = por %p55, %p56
      %p58 = scmp.ne.s32.totalorder %s49, %s50
      %p59 = scmp.eq.s32.totalorder %s18, 0
      %p60 = por %p58, %p59
      %p61 = scmp.ne.s32.totalorder %s49, %s50
      %p62 = scmp.eq.s32.totalorder %s19, 1
      %p63 = por %p61, %p62
      %p65 = scmp.ne.s32.totalorder %s50, %s64
      %p66 = scmp.eq.s32.totalorder %s19, 0
      %p67 = por %p65, %p66
      %s69 = sadd.s32 %s68, 1
      %p72 = scmp.eq.s32.totalorder %s13, 1
      %p73 = scmp.ne.s32.totalorder %s68, %s70
      %p74 = scmp.eq.s32.totalorder %s13, 0
      %p75 = por %p73, %p74
      %p76 = scmp.ne.s32.totalorder %s68, %s70
      %p77 = scmp.eq.s32.totalorder %s18, 1
      %p78 = por %p76, %p77
      %p79 = scmp.ne.s32.totalorder %s70, %s71
      %p80 = scmp.eq.s32.totalorder %s18, 0
      %p81 = por %p79, %p80
      %p82 = scmp.ne.s32.totalorder %s70, %s71
      %p83 = scmp.eq.s32.totalorder %s19, 1
      %p84 = por %p82, %p83
      %p86 = scmp.ne.s32.totalorder %s71, %s85
      %p87 = scmp.eq.s32.totalorder %s19, 0
      %p88 = por %p86, %p87
      %s90 = sadd.s32 %s89, 1
      %p93 = scmp.eq.s32.totalorder %s13, 1
      %p94 = scmp.ne.s32.totalorder %s89, %s91
      %p95 = scmp.eq.s32.totalorder %s13, 0
      %p96 = por %p94, %p95
      %p97 = scmp.ne.s32.totalorder %s89, %s91
      %p98 = scmp.eq.s32.totalorder %s18, 1
      %p99 = por %p97, %p98
      %p100 = scmp.ne.s32.totalorder %s91, %s92
      %p101 = scmp.eq.s32.totalorder %s18, 0
      %p102 = por %p100, %p101
      %p103 = scmp.ne.s32.totalorder %s91, %s92
      %p104 = scmp.eq.s32.totalorder %s19, 1
      %p105 = por %p103, %p104
      %p107 = scmp.ne.s32.totalorder %s92, %s106
      %p108 = scmp.eq.s32.totalorder %s19, 0
      %p109 = por %p107, %p108
      %s111 = sadd.s32 %s110, 1
      %p114 = scmp.eq.s32.totalorder %s13, 1
      %p115 = scmp.ne.s32.totalorder %s110, %s112
      %p116 = scmp.eq.s32.totalorder %s13, 0
      %p117 = por %p115, %p116
      %p118 = scmp.ne.s32.totalorder %s110, %s112
      %p119 = scmp.eq.s32.totalorder %s18, 1
      %p120 = por %p118, %p119
      %p121 = scmp.ne.s32.totalorder %s112, %s113
      %p122 = scmp.eq.s32.totalorder %s18, 0
      %p123 = por %p121, %p122
      %p124 = scmp.ne.s32.totalorder %s112, %s113
      %p125 = scmp.eq.s32.totalorder %s19, 1
      %p126 = por %p124, %p125
      %p128 = scmp.ne.s32.totalorder %s113, %s127
      %p129 = scmp.eq.s32.totalorder %s19, 0
      %p130 = por %p128, %p129
      %s132 = sadd.s32 %s131, 1
      %p135 = scmp.eq.s32.totalorder %s13, 1
      %p136 = scmp.ne.s32.totalorder %s131, %s133
      %p137 = scmp.eq.s32.totalorder %s13, 0
      %p138 = por %p136, %p137
      %p139 = scmp.ne.s32.totalorder %s131, %s133
      %p140 = scmp.eq.s32.totalorder %s18, 1
      %p141 = por %p139, %p140
      %p142 = scmp.ne.s32.totalorder %s133, %s134
      %p143 = scmp.eq.s32.totalorder %s18, 0
      %p144 = por %p142, %p143
      %p145 = scmp.ne.s32.totalorder %s133, %s134
      %p146 = scmp.eq.s32.totalorder %s19, 1
      %p147 = por %p145, %p146
      %p149 = scmp.ne.s32.totalorder %s134, %s148
      %p150 = scmp.eq.s32.totalorder %s19, 0
      %p151 = por %p149, %p150
      %s153 = sadd.s32 %s152, 1
      %p156 = scmp.eq.s32.totalorder %s13, 1
      %p157 = scmp.ne.s32.totalorder %s152, %s154
      %p158 = scmp.eq.s32.totalorder %s13, 0
      %p159 = por %p157, %p158
      %p160 = scmp.ne.s32.totalorder %s152, %s154
      %p161 = scmp.eq.s32.totalorder %s18, 1
      %p162 = por %p160, %p161
      %p163 = scmp.ne.s32.totalorder %s154, %s155
      %p164 = scmp.eq.s32.totalorder %s18, 0
      %p165 = por %p163, %p164
      %p166 = scmp.ne.s32.totalorder %s154, %s155
      %p167 = scmp.eq.s32.totalorder %s19, 1
      %p168 = por %p166, %p167
      %p170 = scmp.ne.s32.totalorder %s155, %s169
      %p171 = scmp.eq.s32.totalorder %s19, 0
      %p172 = por %p170, %p171
      %s173 = ssub.s32 %s13, %s20
      %p174 = scmp.eq.s32.totalorder %s173, 0
      %s176 = sadd.s32 %s175, 1
      %s177 = scalar_select %p174, %s175, %s176
      %p180 = pneg %p174
      %p181 = scmp.eq.s32.totalorder %s13, 1
      %p182 = por %p180, %p181
      %p183 = scmp.ne.s32.totalorder %s175, %s178
      %p184 = scmp.eq.s32.totalorder %s13, 0
      %p185 = por %p183, %p184
      %p186 = scmp.ne.s32.totalorder %s175, %s178
      %p187 = scmp.eq.s32.totalorder %s18, 1
      %p188 = por %p186, %p187
      %p189 = scmp.ne.s32.totalorder %s178, %s179
      %p190 = scmp.eq.s32.totalorder %s18, 0
      %p191 = por %p189, %p190
      %p192 = scmp.ne.s32.totalorder %s178, %s179
      %p193 = scmp.eq.s32.totalorder %s19, 1
      %p194 = por %p192, %p193
      %p196 = scmp.ne.s32.totalorder %s179, %s195
      %p197 = scmp.eq.s32.totalorder %s19, 0
      %p198 = por %p196, %p197
      %p199 = scmp.le.s32.totalorder 1, %s13
      %p200 = scmp.lt.s32.totalorder %s13, 3
      %p201 = pnand %p199, %p200
      %p202 = pneg %p201
      // Predicated region
      $region9: #{tpu_custom_call.1} parent=5 // pred_check
        _
      $region10: #{tpu_custom_call.1} parent=5 // pred_check_branch
        %204 = sbr.rel (%p201) target = $region12
      $region11: #{tpu_custom_call.1} parent=5 // pred_region
        %s205 = ssub.s32 %s13, 1
        // Predicated region
        $region13: #{tpu_custom_call.1} parent=11 // pred_check
          %p206 = pneg %p60
        $region14: #{tpu_custom_call.1} parent=11 // pred_check_branch
          %208 = sbr.rel (%p206) target = $region16
        $region15: #{tpu_custom_call.1} parent=11 // pred_region
          _
        $region16: #{tpu_custom_call.1} parent=11 // pred_fallthru
          _
        // Predicated region
        $region17: #{tpu_custom_call.1} parent=11 // pred_check
          %p209 = pneg %p81
        $region18: #{tpu_custom_call.1} parent=11 // pred_check_branch
          %211 = sbr.rel (%p209) target = $region20
        $region19: #{tpu_custom_call.1} parent=11 // pred_region
          _
        $region20: #{tpu_custom_call.1} parent=11 // pred_fallthru
          _
        // Predicated region
        $region21: #{tpu_custom_call.1} parent=11 // pred_check
          %p212 = pneg %p102
        $region22: #{tpu_custom_call.1} parent=11 // pred_check_branch
          %214 = sbr.rel (%p212) target = $region24
        $region23: #{tpu_custom_call.1} parent=11 // pred_region
          _
        $region24: #{tpu_custom_call.1} parent=11 // pred_fallthru
          _
        // Predicated region
        $region25: #{tpu_custom_call.1} parent=11 // pred_check
          %p215 = pneg %p123
        $region26: #{tpu_custom_call.1} parent=11 // pred_check_branch
          %217 = sbr.rel (%p215) target = $region28
        $region27: #{tpu_custom_call.1} parent=11 // pred_region
          _
        $region28: #{tpu_custom_call.1} parent=11 // pred_fallthru
          _
        // Predicated region
        $region29: #{tpu_custom_call.1} parent=11 // pred_check
          %p218 = pneg %p144
        $region30: #{tpu_custom_call.1} parent=11 // pred_check_branch
          %220 = sbr.rel (%p218) target = $region32
        $region31: #{tpu_custom_call.1} parent=11 // pred_region
          _
        $region32: #{tpu_custom_call.1} parent=11 // pred_fallthru
          _
        // Predicated region
        $region33: #{tpu_custom_call.1} parent=11 // pred_check
          %p221 = pneg %p165
        $region34: #{tpu_custom_call.1} parent=11 // pred_check_branch
          %223 = sbr.rel (%p221) target = $region36
        $region35: #{tpu_custom_call.1} parent=11 // pred_region
          _
        $region36: #{tpu_custom_call.1} parent=11 // pred_fallthru
          _
      $region12: #{tpu_custom_call.1} parent=5 // pred_fallthru
        _
      %p224 = scmp.lt.s32.totalorder %s13, 2
      // Predicated region
      $region37: #{tpu_custom_call.1} parent=5 // pred_check
        %p225 = pneg %p224
      $region38: #{tpu_custom_call.1} parent=5 // pred_check_branch
        %227 = sbr.rel (%p225) target = $region40
      $region39: #{tpu_custom_call.1} parent=5 // pred_region
        // Predicated region
        $region41: #{tpu_custom_call.1} parent=39 // pred_check
          %p228 = pneg %p33
        $region42: #{tpu_custom_call.1} parent=39 // pred_check_branch
          %230 = sbr.rel (%p228) target = $region44
        $region43: #{tpu_custom_call.1} parent=39 // pred_region
          %s231 = smul.u32 32, %s13
          %s232 = ssub.s32 38, %s231
          %p233 = scmp.lt.s32.totalorder %s232, 32
          %s234 = scalar_select %p233, %s232, 32
          %s235 = smul.u32 128, %s234
          %p236 = scmp.lt.s32.totalorder %s231, 37
          %s237 = scalar_select %p236, %s231, 37
          %s238 = smul.addr %s237, 8
          %s239 = scalar_lea.vmem %s0, %s238
          %s240 = smul.u32 32, %s13
          %s241 = ssub.s32 38, %s240
          %p242 = scmp.lt.s32.totalorder %s241, 32
          %s243 = scalar_select %p242, %s241, 32
          %s244 = smul.u32 128, %s243
        $region44: #{tpu_custom_call.1} parent=39 // pred_fallthru
          _
      $region40: #{tpu_custom_call.1} parent=5 // pred_fallthru
        _
      %p245 = scmp.le.s32.totalorder 1, %s13
      %p246 = scmp.lt.s32.totalorder %s13, 3
      %p247 = pnand %p245, %p246
      %p248 = pneg %p247
      // Predicated region
      $region45: #{tpu_custom_call.1} parent=5 // pred_check
        _
      $region46: #{tpu_custom_call.1} parent=5 // pred_check_branch
        %250 = sbr.rel (%p247) target = $region48
      $region47: #{tpu_custom_call.1} parent=5 // pred_region
        %s251 = ssub.s32 %s13, 1
        %s252 = smul.u32 32, %s18
        %s253 = ssub.s32 38, %s252
        %p254 = scmp.lt.s32.totalorder %s253, 32
        %s255 = scalar_select %p254, %s253, 32
        %s256 = smul.u32 128, %s255
        %p257 = scmp.lt.s32.totalorder %s252, 37
        %s258 = scalar_select %p257, %s252, 37
        %s259 = smul.addr %s258, 8
        %s260 = scalar_lea.vmem %s0, %s259
        %p261 = pneg %p39
        %p262 = pneg %p36
        %p263 = pneg %p60
        %p264 = pneg %p57
        %p265 = pneg %p81
        %p266 = pneg %p78
        %p267 = pneg %p102
        %p268 = pneg %p99
        %p269 = pneg %p123
        %p270 = pneg %p120
        %p271 = pneg %p144
        %p272 = pneg %p141
        %p273 = pneg %p165
        %p274 = pneg %p162
        %p275 = pneg %p191
        %p276 = pneg %p188
        %s277 = sand.u32 %s178, 1
        %s278 = sand.u32 %s178, 1
        %s279 = smul.addr %s278, 256
        %s280 = scalar_lea.vmem [#allocation2], %s279
        %s281 = smul.u32 32, %s18
        %s282 = ssub.s32 38, %s281
        %p283 = scmp.lt.s32.totalorder %s282, 32
        %s284 = scalar_select %p283, %s282, 32
        %s285 = smul.u32 128, %s284
        %p286 = scmp.lt.s32.totalorder %s281, 37
        %s287 = scalar_select %p286, %s281, 37
        %s288 = smul.addr %s287, 8
        %s289 = scalar_lea.vmem %s0, %s288
        %s290 = smul.u32 32, %s18
        %s291 = ssub.s32 38, %s290
        %p292 = scmp.lt.s32.totalorder %s291, 32
        %s293 = scalar_select %p292, %s291, 32
        %s294 = smul.u32 128, %s293
        %s295 = smul.u32 32, %s18
        %s296 = ssub.s32 38, %s295
        %p297 = scmp.lt.s32.totalorder %s296, 32
        %s298 = scalar_select %p297, %s296, 32
        %s299 = smul.u32 128, %s298
        %v300 = vld [vmem:[%s289] sm:$0xff]
        %v301 = vld [vmem:[%s289 + $0x8] sm:$0xff]
        %v302 = vld [vmem:[%s289 + $0x10] sm:$0xff]
        %v303 = vld [vmem:[%s289 + $0x18] sm:$0xff]
        %v304 = vld [vmem:[%s289 + $0x20] sm:$0xff]
        %v305 = vld [vmem:[%s289 + $0x28] sm:$0xff]
        %v306 = vld [vmem:[%s289 + $0x30] sm:$0xff]
        %v307 = vld [vmem:[%s289 + $0x38] sm:$0xff]
        %v308 = vld [vmem:[%s289 + $0x40] sm:$0xff]
        %v309 = vld [vmem:[%s289 + $0x48] sm:$0xff]
        %v310 = vld [vmem:[%s289 + $0x50] sm:$0xff]
        %v311 = vld [vmem:[%s289 + $0x58] sm:$0xff]
        %v312 = vld [vmem:[%s289 + $0x60] sm:$0xff]
        %v313 = vld [vmem:[%s289 + $0x68] sm:$0xff]
        %v314 = vld [vmem:[%s289 + $0x70] sm:$0xff]
        %v315 = vld [vmem:[%s289 + $0x78] sm:$0xff]
        %v316 = vld [vmem:[%s289 + $0x80] sm:$0xff]
        %v317 = vld [vmem:[%s289 + $0x88] sm:$0xff]
        %v318 = vld [vmem:[%s289 + $0x90] sm:$0xff]
        %v319 = vld [vmem:[%s289 + $0x98] sm:$0xff]
        %v320 = vld [vmem:[%s289 + $0xa0] sm:$0xff]
        %v321 = vld [vmem:[%s289 + $0xa8] sm:$0xff]
        %v322 = vld [vmem:[%s289 + $0xb0] sm:$0xff]
        %v323 = vld [vmem:[%s289 + $0xb8] sm:$0xff]
        %v324 = vld [vmem:[%s289 + $0xc0] sm:$0xff]
        %v325 = vld [vmem:[%s289 + $0xc8] sm:$0xff]
        %v326 = vld [vmem:[%s289 + $0xd0] sm:$0xff]
        %v327 = vld [vmem:[%s289 + $0xd8] sm:$0xff]
        %v328 = vld [vmem:[%s289 + $0xe0] sm:$0xff]
        %v329 = vld [vmem:[%s289 + $0xe8] sm:$0xff]
        %v330 = vld [vmem:[%s289 + $0xf0] sm:$0xff]
        %v331 = vld [vmem:[%s289 + $0xf8] sm:$0xff]
        %v332 = vld [vmem:[%s1] sm:$0xff]
        %v333 = vld [vmem:[%s1 + $0x8] sm:$0xff]
        %v334 = vld [vmem:[%s2] sm:$0xff]
        %v335 = vld [vmem:[%s2 + $0x8] sm:$0xff]
        %337 = vset.pattern.permute.xlu0 0
        %338 = vperm.xlu0 %337, %v334
        %v339 = vpop.permute.xlu0 %338
        %342 = vset.pattern.permute.xlu0 0
        %343 = vperm.xlu0 %342, %v335
        %v344 = vpop.permute.xlu0 %343
        %vm346 = vcmask 130048
        %v348 = vsel %vm346, %v332, 0
        %v351 = vsel %vm346, %v333, 0
        %v354 = vsel %vm346, %v300, 0
        %v357 = vsel %vm346, %v301, 0
        %v360 = vsel %vm346, %v302, 0
        %v363 = vsel %vm346, %v303, 0
        %v366 = vsel %vm346, %v304, 0
        %v369 = vsel %vm346, %v305, 0
        %v372 = vsel %vm346, %v306, 0
        %v375 = vsel %vm346, %v307, 0
        %v378 = vsel %vm346, %v308, 0
        %v381 = vsel %vm346, %v309, 0
        %v384 = vsel %vm346, %v310, 0
        %v387 = vsel %vm346, %v311, 0
        %v390 = vsel %vm346, %v312, 0
        %v393 = vsel %vm346, %v313, 0
        %v396 = vsel %vm346, %v314, 0
        %v399 = vsel %vm346, %v315, 0
        %v402 = vsel %vm346, %v316, 0
        %v405 = vsel %vm346, %v317, 0
        %v408 = vsel %vm346, %v318, 0
        %v411 = vsel %vm346, %v319, 0
        %v414 = vsel %vm346, %v320, 0
        %v417 = vsel %vm346, %v321, 0
        %v420 = vsel %vm346, %v322, 0
        %v423 = vsel %vm346, %v323, 0
        %v426 = vsel %vm346, %v324, 0
        %v429 = vsel %vm346, %v325, 0
        %v432 = vsel %vm346, %v326, 0
        %v435 = vsel %vm346, %v327, 0
        %v438 = vsel %vm346, %v328, 0
        %v441 = vsel %vm346, %v329, 0
        %v444 = vsel %vm346, %v330, 0
        %v447 = vsel %vm346, %v331, 0
        %449 = vmatprep.subr.mxu0 0.0
        %450 = vmatpush1.xpose.msra.mxu0 %v354
        %451 = vmatprep.subr.mxu0 0.0
        %452 = vmatpush1.xpose.msra.mxu0 %v357
        %453 = vmatprep.subr.mxu0 0.0
        %454 = vmatpush1.xpose.msra.mxu0 %v360
        %455 = vmatprep.subr.mxu0 0.0
        %456 = vmatpush1.xpose.msra.mxu0 %v363
        %457 = vmatprep.subr.mxu0 0.0
        %458 = vmatpush1.xpose.msra.mxu0 %v366
        %459 = vmatprep.subr.mxu0 0.0
        %460 = vmatpush1.xpose.msra.mxu0 %v369
        %461 = vmatprep.subr.mxu0 0.0
        %462 = vmatpush1.xpose.msra.mxu0 %v372
        %463 = vmatprep.subr.mxu0 0.0
        %464 = vmatpush1.xpose.msra.mxu0 %v375
        %465 = vmatprep.subr.mxu0 0.0
        %466 = vmatpush1.xpose.msra.mxu0 %v378
        %467 = vmatprep.subr.mxu0 0.0
        %468 = vmatpush1.xpose.msra.mxu0 %v381
        %469 = vmatprep.subr.mxu0 0.0
        %470 = vmatpush1.xpose.msra.mxu0 %v384
        %471 = vmatprep.subr.mxu0 0.0
        %472 = vmatpush1.xpose.msra.mxu0 %v387
        %473 = vmatprep.subr.mxu0 0.0
        %474 = vmatpush1.xpose.msra.mxu0 %v390
        %475 = vmatprep.subr.mxu0 0.0
        %476 = vmatpush1.xpose.msra.mxu0 %v393
        %477 = vmatprep.subr.mxu0 0.0
        %478 = vmatpush1.xpose.msra.mxu0 %v396
        %479 = vmatprep.subr.mxu0 0.0
        %480 = vmatpush1.xpose.msra.mxu0 %v399
        %481 = vmatprep.subr.mxu0 0.0
        %482 = vmatpush1.xpose.msra.mxu0 %v402
        %483 = vmatprep.subr.mxu0 0.0
        %484 = vmatpush1.xpose.msra.mxu0 %v405
        %485 = vmatprep.subr.mxu0 0.0
        %486 = vmatpush1.xpose.msra.mxu0 %v408
        %487 = vmatprep.subr.mxu0 0.0
        %488 = vmatpush1.xpose.msra.mxu0 %v411
        %489 = vmatprep.subr.mxu0 0.0
        %490 = vmatpush1.xpose.msra.mxu0 %v414
        %491 = vmatprep.subr.mxu0 0.0
        %492 = vmatpush1.xpose.msra.mxu0 %v417
        %493 = vmatprep.subr.mxu0 0.0
        %494 = vmatpush1.xpose.msra.mxu0 %v420
        %495 = vmatprep.subr.mxu0 0.0
        %496 = vmatpush1.xpose.msra.mxu0 %v423
        %497 = vmatprep.subr.mxu0 0.0
        %498 = vmatpush1.xpose.msra.mxu0 %v426
        %499 = vmatprep.subr.mxu0 0.0
        %500 = vmatpush1.xpose.msra.mxu0 %v429
        %501 = vmatprep.subr.mxu0 0.0
        %502 = vmatpush1.xpose.msra.mxu0 %v432
        %503 = vmatprep.subr.mxu0 0.0
        %504 = vmatpush1.xpose.msra.mxu0 %v435
        %505 = vmatprep.subr.mxu0 0.0
        %506 = vmatpush1.xpose.msra.mxu0 %v438
        %507 = vmatprep.subr.mxu0 0.0
        %508 = vmatpush1.xpose.msra.mxu0 %v441
        %509 = vmatprep.subr.mxu0 0.0
        %510 = vmatpush1.xpose.msra.mxu0 %v444
        %511 = vmatprep.subr.mxu0 0.0
        %512 = vmatpush1.xpose.msra.mxu0 %v447
        %513 = vmatprep.mubr.f32.mxu0 0.0
        %514 = vmatmul.mubr.f32.gmra.mrb[0].mxu0 %v348
        %v515 = vpop.f32.mrb[0].mxu0
        %v516 = vadd.f32 %v339, %v515
        %v517 = vpop.f32.mrb[0].mxu0
        %v518 = vadd.f32 %v339, %v517
        %519 = vmatprep.mubr.f32.mxu0 0.0
        %520 = vmatmul.mubr.f32.gmra.mrb[0].mxu0 %v351
        %v521 = vpop.f32.mrb[0].mxu0
        %v522 = vadd.f32 %v344, %v521
        %v523 = vpop.f32.mrb[0].mxu0
        %v524 = vadd.f32 %v344, %v523
        %525 = vdwg.mxu0
        %v526 = vmax.f32 %v516, 0.0
        %v527 = vmax.f32 %v518, 0.0
        %v528 = vmax.f32 %v522, 0.0
        %v529 = vmax.f32 %v524, 0.0
        %v530 = vld [vmem:[%s3] sm:$0xff]
        %v531 = vld [vmem:[%s3 + $0x8] sm:$0xff]
        %v532 = vld [vmem:[%s3 + $0x10] sm:$0xff]
        %v533 = vld [vmem:[%s3 + $0x18] sm:$0xff]
        %v534 = vld [vmem:[%s3 + $0x20] sm:$0xff]
        %v535 = vld [vmem:[%s3 + $0x28] sm:$0xff]
        %v536 = vld [vmem:[%s3 + $0x30] sm:$0xff]
        %v537 = vld [vmem:[%s3 + $0x38] sm:$0xff]
        %v538 = vld [vmem:[%s4] sm:$0xff]
        %v539 = vld [vmem:[%s4 + $0x8] sm:$0xff]
        %v540 = vld [vmem:[%s4 + $0x10] sm:$0xff]
        %v541 = vld [vmem:[%s4 + $0x18] sm:$0xff]
        %v542 = vld [vmem:[%s4 + $0x20] sm:$0xff]
        %v543 = vld [vmem:[%s4 + $0x28] sm:$0xff]
        %v544 = vld [vmem:[%s4 + $0x30] sm:$0xff]
        %v545 = vld [vmem:[%s4 + $0x38] sm:$0xff]
        %547 = vset.pattern.permute.xlu0 0
        %548 = vperm.xlu0 %547, %v538
        %v549 = vpop.permute.xlu0 %548
        %552 = vset.pattern.permute.xlu0 0
        %553 = vperm.xlu0 %552, %v539
        %v554 = vpop.permute.xlu0 %553
        %557 = vset.pattern.permute.xlu0 0
        %558 = vperm.xlu0 %557, %v540
        %v559 = vpop.permute.xlu0 %558
        %562 = vset.pattern.permute.xlu0 0
        %563 = vperm.xlu0 %562, %v541
        %v564 = vpop.permute.xlu0 %563
        %567 = vset.pattern.permute.xlu0 0
        %568 = vperm.xlu0 %567, %v542
        %v569 = vpop.permute.xlu0 %568
        %572 = vset.pattern.permute.xlu0 0
        %573 = vperm.xlu0 %572, %v543
        %v574 = vpop.permute.xlu0 %573
        %577 = vset.pattern.permute.xlu0 0
        %578 = vperm.xlu0 %577, %v544
        %v579 = vpop.permute.xlu0 %578
        %582 = vset.pattern.permute.xlu0 0
        %583 = vperm.xlu0 %582, %v545
        %v584 = vpop.permute.xlu0 %583
        %v587 = vsel %vm346, %v530, 0
        %v590 = vsel %vm346, %v531, 0
        %v593 = vsel %vm346, %v532, 0
        %v596 = vsel %vm346, %v533, 0
        %v599 = vsel %vm346, %v534, 0
        %v602 = vsel %vm346, %v535, 0
        %v605 = vsel %vm346, %v536, 0
        %v608 = vsel %vm346, %v537, 0
        %610 = vmatprep.subr.mxu0 %v527
        %611 = vmatpush1.msra.mxu0 %v526
        %612 = vmatprep.subr.mxu0 %v529
        %613 = vmatpush1.msra.mxu0 %v528
        %614 = vmatprep.subr.mxu0 0.0
        %615 = vmatpush1.msra.mxu0 0.0
        %616 = vmatprep.subr.mxu0 0.0
        %617 = vmatpush1.msra.mxu0 0.0
        %618 = vmatprep.subr.mxu0 0.0
        %619 = vmatpush1.msra.mxu0 0.0
        %620 = vmatprep.subr.mxu0 0.0
        %621 = vmatpush1.msra.mxu0 0.0
        %622 = vmatprep.subr.mxu0 0.0
        %623 = vmatpush1.msra.mxu0 0.0
        %624 = vmatprep.subr.mxu0 0.0
        %625 = vmatpush1.msra.mxu0 0.0
        %626 = vmatprep.subr.mxu0 0.0
        %627 = vmatpush1.msra.mxu0 0.0
        %628 = vmatprep.subr.mxu0 0.0
        %629 = vmatpush1.msra.mxu0 0.0
        %630 = vmatprep.subr.mxu0 0.0
        %631 = vmatpush1.msra.mxu0 0.0
        %632 = vmatprep.subr.mxu0 0.0
        %633 = vmatpush1.msra.mxu0 0.0
        %634 = vmatprep.subr.mxu0 0.0
        %635 = vmatpush1.msra.mxu0 0.0
        %636 = vmatprep.subr.mxu0 0.0
        %637 = vmatpush1.msra.mxu0 0.0
        %638 = vmatprep.subr.mxu0 0.0
        %639 = vmatpush1.msra.mxu0 0.0
        %640 = vmatprep.subr.mxu0 0.0
        %641 = vmatpush1.msra.mxu0 0.0
        %642 = vmatprep.subr.mxu0 0.0
        %643 = vmatpush1.msra.mxu0 0.0
        %644 = vmatprep.subr.mxu0 0.0
        %645 = vmatpush1.msra.mxu0 0.0
        %646 = vmatprep.subr.mxu0 0.0
        %647 = vmatpush1.msra.mxu0 0.0
        %648 = vmatprep.subr.mxu0 0.0
        %649 = vmatpush1.msra.mxu0 0.0
        %650 = vmatprep.subr.mxu0 0.0
        %651 = vmatpush1.msra.mxu0 0.0
        %652 = vmatprep.subr.mxu0 0.0
        %653 = vmatpush1.msra.mxu0 0.0
        %654 = vmatprep.subr.mxu0 0.0
        %655 = vmatpush1.msra.mxu0 0.0
        %656 = vmatprep.subr.mxu0 0.0
        %657 = vmatpush1.msra.mxu0 0.0
        %658 = vmatprep.subr.mxu0 0.0
        %659 = vmatpush1.msra.mxu0 0.0
        %660 = vmatprep.subr.mxu0 0.0
        %661 = vmatpush1.msra.mxu0 0.0
        %662 = vmatprep.subr.mxu0 0.0
        %663 = vmatpush1.msra.mxu0 0.0
        %664 = vmatprep.subr.mxu0 0.0
        %665 = vmatpush1.msra.mxu0 0.0
        %666 = vmatprep.subr.mxu0 0.0
        %667 = vmatpush1.msra.mxu0 0.0
        %668 = vmatprep.subr.mxu0 0.0
        %669 = vmatpush1.msra.mxu0 0.0
        %670 = vmatprep.subr.mxu0 0.0
        %671 = vmatpush1.msra.mxu0 0.0
        %672 = vmatprep.subr.mxu0 0.0
        %673 = vmatpush1.msra.mxu0 0.0
        %674 = vmatprep.mubr.f32.mxu0 0.0
        %675 = vmatmul.mubr.f32.gmra.mrb[0].mxu0 %v587
        %v676 = vpop.f32.mrb[0].mxu0
        %v677 = vadd.f32 %v549, %v676
        %v678 = vpop.f32.mrb[0].mxu0
        %v679 = vadd.f32 %v549, %v678
        %680 = vmatprep.mubr.f32.mxu0 0.0
        %681 = vmatmul.mubr.f32.gmra.mrb[0].mxu0 %v590
        %v682 = vpop.f32.mrb[0].mxu0
        %v683 = vadd.f32 %v554, %v682
        %v684 = vpop.f32.mrb[0].mxu0
        %v685 = vadd.f32 %v554, %v684
        %686 = vmatprep.mubr.f32.mxu0 0.0
        %687 = vmatmul.mubr.f32.gmra.mrb[0].mxu0 %v593
        %v688 = vpop.f32.mrb[0].mxu0
        %v689 = vadd.f32 %v559, %v688
        %v690 = vpop.f32.mrb[0].mxu0
        %v691 = vadd.f32 %v559, %v690
        %692 = vmatprep.mubr.f32.mxu0 0.0
        %693 = vmatmul.mubr.f32.gmra.mrb[0].mxu0 %v596
        %v694 = vpop.f32.mrb[0].mxu0
        %v695 = vadd.f32 %v564, %v694
        %v696 = vpop.f32.mrb[0].mxu0
        %v697 = vadd.f32 %v564, %v696
        %698 = vmatprep.mubr.f32.mxu0 0.0
        %699 = vmatmul.mubr.f32.gmra.mrb[0].mxu0 %v599
        %v700 = vpop.f32.mrb[0].mxu0
        %v701 = vadd.f32 %v569, %v700
        %v702 = vpop.f32.mrb[0].mxu0
        %v703 = vadd.f32 %v569, %v702
        %704 = vmatprep.mubr.f32.mxu0 0.0
        %705 = vmatmul.mubr.f32.gmra.mrb[0].mxu0 %v602
        %v706 = vpop.f32.mrb[0].mxu0
        %v707 = vadd.f32 %v574, %v706
        %v708 = vpop.f32.mrb[0].mxu0
        %v709 = vadd.f32 %v574, %v708
        %710 = vmatprep.mubr.f32.mxu0 0.0
        %711 = vmatmul.mubr.f32.gmra.mrb[0].mxu0 %v605
        %v712 = vpop.f32.mrb[0].mxu0
        %v713 = vadd.f32 %v579, %v712
        %v714 = vpop.f32.mrb[0].mxu0
        %v715 = vadd.f32 %v579, %v714
        %716 = vmatprep.mubr.f32.mxu0 0.0
        %717 = vmatmul.mubr.f32.gmra.mrb[0].mxu0 %v608
        %v718 = vpop.f32.mrb[0].mxu0
        %v719 = vadd.f32 %v584, %v718
        %v720 = vpop.f32.mrb[0].mxu0
        %v721 = vadd.f32 %v584, %v720
        %722 = vdwg.mxu0
        %v723 = vmax.f32 %v677, 0.0
        %v724 = vmax.f32 %v679, 0.0
        %v725 = vmax.f32 %v683, 0.0
        %v726 = vmax.f32 %v685, 0.0
        %v727 = vmax.f32 %v689, 0.0
        %v728 = vmax.f32 %v691, 0.0
        %v729 = vmax.f32 %v695, 0.0
        %v730 = vmax.f32 %v697, 0.0
        %v731 = vmax.f32 %v701, 0.0
        %v732 = vmax.f32 %v703, 0.0
        %v733 = vmax.f32 %v707, 0.0
        %v734 = vmax.f32 %v709, 0.0
        %v735 = vmax.f32 %v713, 0.0
        %v736 = vmax.f32 %v715, 0.0
        %v737 = vmax.f32 %v719, 0.0
        %v738 = vmax.f32 %v721, 0.0
        %v739 = vld [vmem:[%s5] sm:$0xff]
        %v740 = vld [vmem:[%s5 + $0x8] sm:$0xff]
        %v741 = vld [vmem:[%s5 + $0x10] sm:$0xff]
        %v742 = vld [vmem:[%s5 + $0x18] sm:$0xff]
        %v743 = vld [vmem:[%s6] sm:$0xff]
        %v744 = vld [vmem:[%s6 + $0x8] sm:$0xff]
        %v745 = vld [vmem:[%s6 + $0x10] sm:$0xff]
        %v746 = vld [vmem:[%s6 + $0x18] sm:$0xff]
        %748 = vset.pattern.permute.xlu0 0
        %749 = vperm.xlu0 %748, %v743
        %v750 = vpop.permute.xlu0 %749
        %753 = vset.pattern.permute.xlu0 0
        %754 = vperm.xlu0 %753, %v744
        %v755 = vpop.permute.xlu0 %754
        %758 = vset.pattern.permute.xlu0 0
        %759 = vperm.xlu0 %758, %v745
        %v760 = vpop.permute.xlu0 %759
        %763 = vset.pattern.permute.xlu0 0
        %764 = vperm.xlu0 %763, %v746
        %v765 = vpop.permute.xlu0 %764
        %vm767 = vcmask 523264
        %v769 = vsel %vm767, %v739, 0
        %v772 = vsel %vm767, %v740, 0
        %v775 = vsel %vm767, %v741, 0
        %v778 = vsel %vm767, %v742, 0
        %780 = vmatprep.subr.mxu0 %v724
        %781 = vmatpush1.msra.mxu0 %v723
        %782 = vmatprep.subr.mxu0 %v726
        %783 = vmatpush1.msra.mxu0 %v725
        %784 = vmatprep.subr.mxu0 %v728
        %785 = vmatpush1.msra.mxu0 %v727
        %786 = vmatprep.subr.mxu0 %v730
        %787 = vmatpush1.msra.mxu0 %v729
        %788 = vmatprep.subr.mxu0 %v732
        %789 = vmatpush1.msra.mxu0 %v731
        %790 = vmatprep.subr.mxu0 %v734
        %791 = vmatpush1.msra.mxu0 %v733
        %792 = vmatprep.subr.mxu0 %v736
        %793 = vmatpush1.msra.mxu0 %v735
        %794 = vmatprep.subr.mxu0 %v738
        %795 = vmatpush1.msra.mxu0 %v737
        %796 = vmatprep.subr.mxu0 0.0
        %797 = vmatpush1.msra.mxu0 0.0
        %798 = vmatprep.subr.mxu0 0.0
        %799 = vmatpush1.msra.mxu0 0.0
        %800 = vmatprep.subr.mxu0 0.0
        %801 = vmatpush1.msra.mxu0 0.0
        %802 = vmatprep.subr.mxu0 0.0
        %803 = vmatpush1.msra.mxu0 0.0
        %804 = vmatprep.subr.mxu0 0.0
        %805 = vmatpush1.msra.mxu0 0.0
        %806 = vmatprep.subr.mxu0 0.0
        %807 = vmatpush1.msra.mxu0 0.0
        %808 = vmatprep.subr.mxu0 0.0
        %809 = vmatpush1.msra.mxu0 0.0
        %810 = vmatprep.subr.mxu0 0.0
        %811 = vmatpush1.msra.mxu0 0.0
        %812 = vmatprep.subr.mxu0 0.0
        %813 = vmatpush1.msra.mxu0 0.0
        %814 = vmatprep.subr.mxu0 0.0
        %815 = vmatpush1.msra.mxu0 0.0
        %816 = vmatprep.subr.mxu0 0.0
        %817 = vmatpush1.msra.mxu0 0.0
        %818 = vmatprep.subr.mxu0 0.0
        %819 = vmatpush1.msra.mxu0 0.0
        %820 = vmatprep.subr.mxu0 0.0
        %821 = vmatpush1.msra.mxu0 0.0
        %822 = vmatprep.subr.mxu0 0.0
        %823 = vmatpush1.msra.mxu0 0.0
        %824 = vmatprep.subr.mxu0 0.0
        %825 = vmatpush1.msra.mxu0 0.0
        %826 = vmatprep.subr.mxu0 0.0
        %827 = vmatpush1.msra.mxu0 0.0
        %828 = vmatprep.subr.mxu0 0.0
        %829 = vmatpush1.msra.mxu0 0.0
        %830 = vmatprep.subr.mxu0 0.0
        %831 = vmatpush1.msra.mxu0 0.0
        %832 = vmatprep.subr.mxu0 0.0
        %833 = vmatpush1.msra.mxu0 0.0
        %834 = vmatprep.subr.mxu0 0.0
        %835 = vmatpush1.msra.mxu0 0.0
        %836 = vmatprep.subr.mxu0 0.0
        %837 = vmatpush1.msra.mxu0 0.0
        %838 = vmatprep.subr.mxu0 0.0
        %839 = vmatpush1.msra.mxu0 0.0
        %840 = vmatprep.subr.mxu0 0.0
        %841 = vmatpush1.msra.mxu0 0.0
        %842 = vmatprep.subr.mxu0 0.0
        %843 = vmatpush1.msra.mxu0 0.0
        %844 = vmatprep.mubr.f32.mxu0 0.0
        %845 = vmatmul.mubr.f32.gmra.mrb[0].mxu0 %v769
        %v846 = vpop.f32.mrb[0].mxu0
        %v847 = vadd.f32 %v750, %v846
        %v848 = vpop.f32.mrb[0].mxu0
        %v849 = vadd.f32 %v750, %v848
        %850 = vmatprep.mubr.f32.mxu0 0.0
        %851 = vmatmul.mubr.f32.gmra.mrb[0].mxu0 %v772
        %v852 = vpop.f32.mrb[0].mxu0
        %v853 = vadd.f32 %v755, %v852
        %v854 = vpop.f32.mrb[0].mxu0
        %v855 = vadd.f32 %v755, %v854
        %856 = vmatprep.mubr.f32.mxu0 0.0
        %857 = vmatmul.mubr.f32.gmra.mrb[0].mxu0 %v775
        %v858 = vpop.f32.mrb[0].mxu0
        %v859 = vadd.f32 %v760, %v858
        %v860 = vpop.f32.mrb[0].mxu0
        %v861 = vadd.f32 %v760, %v860
        %862 = vmatprep.mubr.f32.mxu0 0.0
        %863 = vmatmul.mubr.f32.gmra.mrb[0].mxu0 %v778
        %v864 = vpop.f32.mrb[0].mxu0
        %v865 = vadd.f32 %v765, %v864
        %v866 = vpop.f32.mrb[0].mxu0
        %v867 = vadd.f32 %v765, %v866
        %868 = vdwg.mxu0
        %v869 = vmax.f32 %v847, 0.0
        %v870 = vmax.f32 %v849, 0.0
        %v871 = vmax.f32 %v853, 0.0
        %v872 = vmax.f32 %v855, 0.0
        %v873 = vmax.f32 %v859, 0.0
        %v874 = vmax.f32 %v861, 0.0
        %v875 = vmax.f32 %v865, 0.0
        %v876 = vmax.f32 %v867, 0.0
        %877 = vxpose.xlu0.b32.start [1/16] %v869, 128
        %878 = vxpose.xlu0.b32.cont [2/16] %v871, 128
        %879 = vxpose.xlu0.b32.cont [3/16] %v873, 128
        %880 = vxpose.xlu0.b32.cont [4/16] %v875, 128
        %881 = vxpose.xlu0.b32.cont [5/16] 0.0, 128
        %882 = vxpose.xlu0.b32.cont [6/16] 0.0, 128
        %883 = vxpose.xlu0.b32.cont [7/16] 0.0, 128
        %884 = vxpose.xlu0.b32.cont [8/16] 0.0, 128
        %885 = vxpose.xlu0.b32.cont [9/16] 0.0, 128
        %886 = vxpose.xlu0.b32.cont [10/16] 0.0, 128
        %887 = vxpose.xlu0.b32.cont [11/16] 0.0, 128
        %888 = vxpose.xlu0.b32.cont [12/16] 0.0, 128
        %889 = vxpose.xlu0.b32.cont [13/16] 0.0, 128
        %890 = vxpose.xlu0.b32.cont [14/16] 0.0, 128
        %891 = vxpose.xlu0.b32.cont [15/16] 0.0, 128
        %892 = vxpose.xlu0.b32.end [16/16] 0.0, 128
        %v893 = vpop.trf.xlu0
        %v894 = vpop.trf.xlu0
        %v895 = vpop.trf.xlu0
        %v896 = vpop.trf.xlu0
        %v897 = vpop.trf.xlu0
        %v898 = vpop.trf.xlu0
        %v899 = vpop.trf.xlu0
        %v900 = vpop.trf.xlu0
        %v901 = vpop.trf.xlu0
        %v902 = vpop.trf.xlu0
        %v903 = vpop.trf.xlu0
        %v904 = vpop.trf.xlu0
        %v905 = vpop.trf.xlu0
        %v906 = vpop.trf.xlu0
        %v907 = vpop.trf.xlu0
        %v908 = vpop.trf.xlu0
        %909 = vxpose.xlu0.b32.start [1/16] %v870, 128
        %910 = vxpose.xlu0.b32.cont [2/16] %v872, 128
        %911 = vxpose.xlu0.b32.cont [3/16] %v874, 128
        %912 = vxpose.xlu0.b32.cont [4/16] %v876, 128
        %913 = vxpose.xlu0.b32.cont [5/16] 0.0, 128
        %914 = vxpose.xlu0.b32.cont [6/16] 0.0, 128
        %915 = vxpose.xlu0.b32.cont [7/16] 0.0, 128
        %916 = vxpose.xlu0.b32.cont [8/16] 0.0, 128
        %917 = vxpose.xlu0.b32.cont [9/16] 0.0, 128
        %918 = vxpose.xlu0.b32.cont [10/16] 0.0, 128
        %919 = vxpose.xlu0.b32.cont [11/16] 0.0, 128
        %920 = vxpose.xlu0.b32.cont [12/16] 0.0, 128
        %921 = vxpose.xlu0.b32.cont [13/16] 0.0, 128
        %922 = vxpose.xlu0.b32.cont [14/16] 0.0, 128
        %923 = vxpose.xlu0.b32.cont [15/16] 0.0, 128
        %924 = vxpose.xlu0.b32.end [16/16] 0.0, 128
        %v925 = vpop.trf.xlu0
        %v926 = vpop.trf.xlu0
        %v927 = vpop.trf.xlu0
        %v928 = vpop.trf.xlu0
        %v929 = vpop.trf.xlu0
        %v930 = vpop.trf.xlu0
        %v931 = vpop.trf.xlu0
        %v932 = vpop.trf.xlu0
        %v933 = vpop.trf.xlu0
        %v934 = vpop.trf.xlu0
        %v935 = vpop.trf.xlu0
        %v936 = vpop.trf.xlu0
        %v937 = vpop.trf.xlu0
        %v938 = vpop.trf.xlu0
        %v939 = vpop.trf.xlu0
        %v940 = vpop.trf.xlu0
        %vm941 = vcmask 261120
        %942 = vst.msk [vmem:[%s280] sm:$0xff] %vm941, %v893
        %943 = vst.msk [vmem:[%s280 + $0x8] sm:$0xff] %vm941, %v894
        %944 = vst.msk [vmem:[%s280 + $0x10] sm:$0xff] %vm941, %v895
        %945 = vst.msk [vmem:[%s280 + $0x18] sm:$0xff] %vm941, %v896
        %946 = vst.msk [vmem:[%s280 + $0x20] sm:$0xff] %vm941, %v897
        %947 = vst.msk [vmem:[%s280 + $0x28] sm:$0xff] %vm941, %v898
        %948 = vst.msk [vmem:[%s280 + $0x30] sm:$0xff] %vm941, %v899
        %949 = vst.msk [vmem:[%s280 + $0x38] sm:$0xff] %vm941, %v900
        %950 = vst.msk [vmem:[%s280 + $0x40] sm:$0xff] %vm941, %v901
        %951 = vst.msk [vmem:[%s280 + $0x48] sm:$0xff] %vm941, %v902
        %952 = vst.msk [vmem:[%s280 + $0x50] sm:$0xff] %vm941, %v903
        %953 = vst.msk [vmem:[%s280 + $0x58] sm:$0xff] %vm941, %v904
        %954 = vst.msk [vmem:[%s280 + $0x60] sm:$0xff] %vm941, %v905
        %955 = vst.msk [vmem:[%s280 + $0x68] sm:$0xff] %vm941, %v906
        %956 = vst.msk [vmem:[%s280 + $0x70] sm:$0xff] %vm941, %v907
        %957 = vst.msk [vmem:[%s280 + $0x78] sm:$0xff] %vm941, %v908
        %958 = vst.msk [vmem:[%s280 + $0x80] sm:$0xff] %vm941, %v925
        %959 = vst.msk [vmem:[%s280 + $0x88] sm:$0xff] %vm941, %v926
        %960 = vst.msk [vmem:[%s280 + $0x90] sm:$0xff] %vm941, %v927
        %961 = vst.msk [vmem:[%s280 + $0x98] sm:$0xff] %vm941, %v928
        %962 = vst.msk [vmem:[%s280 + $0xa0] sm:$0xff] %vm941, %v929
        %963 = vst.msk [vmem:[%s280 + $0xa8] sm:$0xff] %vm941, %v930
        %964 = vst.msk [vmem:[%s280 + $0xb0] sm:$0xff] %vm941, %v931
        %965 = vst.msk [vmem:[%s280 + $0xb8] sm:$0xff] %vm941, %v932
        %966 = vst.msk [vmem:[%s280 + $0xc0] sm:$0xff] %vm941, %v933
        %967 = vst.msk [vmem:[%s280 + $0xc8] sm:$0xff] %vm941, %v934
        %968 = vst.msk [vmem:[%s280 + $0xd0] sm:$0xff] %vm941, %v935
        %969 = vst.msk [vmem:[%s280 + $0xd8] sm:$0xff] %vm941, %v936
        %970 = vst.msk [vmem:[%s280 + $0xe0] sm:$0xff] %vm941, %v937
        %971 = vst.msk [vmem:[%s280 + $0xe8] sm:$0xff] %vm941, %v938
        %972 = vst.msk [vmem:[%s280 + $0xf0] sm:$0xff] %vm941, %v939
        %973 = vst.msk [vmem:[%s280 + $0xf8] sm:$0xff] %vm941, %v940
        %s974 = sand.u32 %s178, 1
        %s975 = sand.u32 %s178, 1
        %s976 = smul.addr %s975, 256
        %s977 = scalar_lea.vmem [#allocation2], %s976
        // Predicated region
        $region49: #{tpu_custom_call.1} parent=47 // pred_check
          %p978 = pneg %p188
        $region50: #{tpu_custom_call.1} parent=47 // pred_check_branch
          %980 = sbr.rel (%p978) target = $region52
        $region51: #{tpu_custom_call.1} parent=47 // pred_region
          %s981 = smul.u32 32, %s18
          %s982 = ssub.s32 38, %s981
          %p983 = scmp.lt.s32.totalorder %s982, 32
          %s984 = scalar_select %p983, %s982, 32
          %s985 = smul.u32 128, %s984
          %p986 = scmp.ne.s32.totalorder 0, %s985
          %s987 = smul.addr %s981, 8
          %s988 = scalar_lea.vmem %s7, %s987
          // Predicated region
          $region53: #{tpu_custom_call.1} parent=51 // pred_check
            %p989 = pneg %p986
          $region54: #{tpu_custom_call.1} parent=51 // pred_check_branch
            %991 = sbr.rel (%p989) target = $region56
          $region55: #{tpu_custom_call.1} parent=51 // pred_region
            // Predicated region
            $region57: #{tpu_custom_call.1} parent=55 // pred_check
              _
            $region58: #{tpu_custom_call.1} parent=55 // pred_check_branch
              %993 = sbr.rel (0) target = $region60
            $region59: #{tpu_custom_call.1} parent=55 // pred_region
              // Predicated region
              $region79: #{tpu_custom_call.1} parent=59 // pred_check
                _
              $region80: #{tpu_custom_call.1} parent=59 // pred_check_branch
                %1104 = sbr.rel (0) target = $region82
              $region81: #{tpu_custom_call.1} parent=59 // pred_region
                %s1105 = sshrl.u32 %s984, 5
                // While loop
                $region83: #{tpu_custom_call.1} parent=81 // loop_pre_header
                  _
                $region84: #{tpu_custom_call.1} parent=81 // loop_header
                  %s1107 = sphi 0, %s1109
                  %p1108 = scmp.ge.s32.totalorder %s1107, %s1105
                  %s1112 = sphi 0, %s1181
                  %s1113 = sphi %s977, %s1184
                  %s1114 = sphi %s988, %s1185
                $region85: #{tpu_custom_call.1} parent=81 // loop_header_branch
                  %1111 = sbr.rel (%p1108) target = $region89
                $region86: #{tpu_custom_call.1} parent=81 // loop_body
                  %v1115 = vld [vmem:[%s1113] sm:$0xff]
                  %1116 = vst [vmem:[%s1114] sm:$0xff] %v1115
                  %v1117 = vld [vmem:[%s1113 + $0x8] sm:$0xff]
                  %1118 = vst [vmem:[%s1114 + $0x8] sm:$0xff] %v1117
                  %v1119 = vld [vmem:[%s1113 + $0x10] sm:$0xff]
                  %1120 = vst [vmem:[%s1114 + $0x10] sm:$0xff] %v1119
                  %v1121 = vld [vmem:[%s1113 + $0x18] sm:$0xff]
                  %1122 = vst [vmem:[%s1114 + $0x18] sm:$0xff] %v1121
                  %v1123 = vld [vmem:[%s1113 + $0x20] sm:$0xff]
                  %1124 = vst [vmem:[%s1114 + $0x20] sm:$0xff] %v1123
                  %v1125 = vld [vmem:[%s1113 + $0x28] sm:$0xff]
                  %1126 = vst [vmem:[%s1114 + $0x28] sm:$0xff] %v1125
                  %v1127 = vld [vmem:[%s1113 + $0x30] sm:$0xff]
                  %1128 = vst [vmem:[%s1114 + $0x30] sm:$0xff] %v1127
                  %v1129 = vld [vmem:[%s1113 + $0x38] sm:$0xff]
                  %1130 = vst [vmem:[%s1114 + $0x38] sm:$0xff] %v1129
                  %v1131 = vld [vmem:[%s1113 + $0x40] sm:$0xff]
                  %1132 = vst [vmem:[%s1114 + $0x40] sm:$0xff] %v1131
                  %v1133 = vld [vmem:[%s1113 + $0x48] sm:$0xff]
                  %1134 = vst [vmem:[%s1114 + $0x48] sm:$0xff] %v1133
                  %v1135 = vld [vmem:[%s1113 + $0x50] sm:$0xff]
                  %1136 = vst [vmem:[%s1114 + $0x50] sm:$0xff] %v1135
                  %v1137 = vld [vmem:[%s1113 + $0x58] sm:$0xff]
                  %1138 = vst [vmem:[%s1114 + $0x58] sm:$0xff] %v1137
                  %v1139 = vld [vmem:[%s1113 + $0x60] sm:$0xff]
                  %1140 = vst [vmem:[%s1114 + $0x60] sm:$0xff] %v1139
                  %v1141 = vld [vmem:[%s1113 + $0x68] sm:$0xff]
                  %1142 = vst [vmem:[%s1114 + $0x68] sm:$0xff] %v1141
                  %v1143 = vld [vmem:[%s1113 + $0x70] sm:$0xff]
                  %1144 = vst [vmem:[%s1114 + $0x70] sm:$0xff] %v1143
                  %v1145 = vld [vmem:[%s1113 + $0x78] sm:$0xff]
                  %1146 = vst [vmem:[%s1114 + $0x78] sm:$0xff] %v1145
                  %v1147 = vld [vmem:[%s1113 + $0x80] sm:$0xff]
                  %1148 = vst [vmem:[%s1114 + $0x80] sm:$0xff] %v1147
                  %v1149 = vld [vmem:[%s1113 + $0x88] sm:$0xff]
                  %1150 = vst [vmem:[%s1114 + $0x88] sm:$0xff] %v1149
                  %v1151 = vld [vmem:[%s1113 + $0x90] sm:$0xff]
                  %1152 = vst [vmem:[%s1114 + $0x90] sm:$0xff] %v1151
                  %v1153 = vld [vmem:[%s1113 + $0x98] sm:$0xff]
                  %1154 = vst [vmem:[%s1114 + $0x98] sm:$0xff] %v1153
                  %v1155 = vld [vmem:[%s1113 + $0xa0] sm:$0xff]
                  %1156 = vst [vmem:[%s1114 + $0xa0] sm:$0xff] %v1155
                  %v1157 = vld [vmem:[%s1113 + $0xa8] sm:$0xff]
                  %1158 = vst [vmem:[%s1114 + $0xa8] sm:$0xff] %v1157
                  %v1159 = vld [vmem:[%s1113 + $0xb0] sm:$0xff]
                  %1160 = vst [vmem:[%s1114 + $0xb0] sm:$0xff] %v1159
                  %v1161 = vld [vmem:[%s1113 + $0xb8] sm:$0xff]
                  %1162 = vst [vmem:[%s1114 + $0xb8] sm:$0xff] %v1161
                  %v1163 = vld [vmem:[%s1113 + $0xc0] sm:$0xff]
                  %1164 = vst [vmem:[%s1114 + $0xc0] sm:$0xff] %v1163
                  %v1165 = vld [vmem:[%s1113 + $0xc8] sm:$0xff]
                  %1166 = vst [vmem:[%s1114 + $0xc8] sm:$0xff] %v1165
                  %v1167 = vld [vmem:[%s1113 + $0xd0] sm:$0xff]
                  %1168 = vst [vmem:[%s1114 + $0xd0] sm:$0xff] %v1167
                  %v1169 = vld [vmem:[%s1113 + $0xd8] sm:$0xff]
                  %1170 = vst [vmem:[%s1114 + $0xd8] sm:$0xff] %v1169
                  %v1171 = vld [vmem:[%s1113 + $0xe0] sm:$0xff]
                  %1172 = vst [vmem:[%s1114 + $0xe0] sm:$0xff] %v1171
                  %v1173 = vld [vmem:[%s1113 + $0xe8] sm:$0xff]
                  %1174 = vst [vmem:[%s1114 + $0xe8] sm:$0xff] %v1173
                  %v1175 = vld [vmem:[%s1113 + $0xf0] sm:$0xff]
                  %1176 = vst [vmem:[%s1114 + $0xf0] sm:$0xff] %v1175
                  %v1177 = vld [vmem:[%s1113 + $0xf8] sm:$0xff]
                  %1178 = vst [vmem:[%s1114 + $0xf8] sm:$0xff] %v1177
                  %s1179 = sadd.s32 1, %s1112
                  %p1180 = scmp.ge.s32.totalorder %s1179, %s1105
                  %s1181 = scalar_select %p1180, 0, %s1179
                  %s1182 = smul.u32 %s1181, 256
                  %s1183 = smul.u32 %s1181, 256
                  %s1184 = scalar_lea.vmem %s977, %s1182 [#allocation2]
                  %s1185 = scalar_lea.vmem %s988, %s1183
                $region87: #{tpu_custom_call.1} parent=81 // loop_footer
                  %s1109 = sadd.s32 %s1107, 1
                $region88: #{tpu_custom_call.1} parent=81 // loop_footer_branch
                  %1106 = sbr.rel target = $region84
                $region89: #{tpu_custom_call.1} parent=81 // loop_exit
                  _
                %s1186 = sshrl.u32 %s984, 5
                %s1187 = sand.u32 %s984, 31
                %s1188 = smul.u32 %s1186, 32
                %s1189 = smul.u32 8, %s1188
                %s1190 = scalar_lea.vmem %s977, %s1189 [#allocation2]
                %s1191 = smul.u32 8, %s1188
                %s1192 = scalar_lea.vmem %s988, %s1191
                // While loop
                $region90: #{tpu_custom_call.1} parent=81 // loop_pre_header
                  _
                $region91: #{tpu_custom_call.1} parent=81 // loop_header
                  %s1194 = sphi 0, %s1196
                  %p1195 = scmp.ge.s32.totalorder %s1194, %s1187
                  %s1199 = sphi 0, %s1206
                  %s1200 = sphi %s1190, %s1209
                  %s1201 = sphi %s1192, %s1210
                $region92: #{tpu_custom_call.1} parent=81 // loop_header_branch
                  %1198 = sbr.rel (%p1195) target = $region96
                $region93: #{tpu_custom_call.1} parent=81 // loop_body
                  %v1202 = vld [vmem:[%s1200] sm:$0xff]
                  %1203 = vst [vmem:[%s1201] sm:$0xff] %v1202
                  %s1204 = sadd.s32 1, %s1199
                  %p1205 = scmp.ge.s32.totalorder %s1204, %s1187
                  %s1206 = scalar_select %p1205, 0, %s1204
                  %s1207 = smul.u32 %s1206, 8
                  %s1208 = smul.u32 %s1206, 8
                  %s1209 = scalar_lea.vmem %s1190, %s1207 [#allocation2]
                  %s1210 = scalar_lea.vmem %s1192, %s1208
                $region94: #{tpu_custom_call.1} parent=81 // loop_footer
                  %s1196 = sadd.s32 %s1194, 1
                $region95: #{tpu_custom_call.1} parent=81 // loop_footer_branch
                  %1193 = sbr.rel target = $region91
                $region96: #{tpu_custom_call.1} parent=81 // loop_exit
                  _
              $region82: #{tpu_custom_call.1} parent=59 // pred_fallthru
                _
              // Predicated region
              $region97: #{tpu_custom_call.1} parent=59 // pred_check
                _
              $region98: #{tpu_custom_call.1} parent=59 // pred_check_branch
                %1212 = sbr.rel target = $region100
              $region99: #{tpu_custom_call.1} parent=59 // pred_region
                _
              $region100: #{tpu_custom_call.1} parent=59 // pred_fallthru
                _
            $region60: #{tpu_custom_call.1} parent=55 // pred_fallthru
              _
            // Predicated region
            $region61: #{tpu_custom_call.1} parent=55 // pred_check
              _
            $region62: #{tpu_custom_call.1} parent=55 // pred_check_branch
              %995 = sbr.rel target = $region64
            $region63: #{tpu_custom_call.1} parent=55 // pred_region
              %s997 = sshrl.u32 %s984, 5
              // While loop
              $region65: #{tpu_custom_call.1} parent=63 // loop_pre_header
                _
              $region66: #{tpu_custom_call.1} parent=63 // loop_header
                %s999 = sphi 0, %s1001
                %p1000 = scmp.ge.s32.totalorder %s999, %s997
                %s1004 = sphi 0, %s1073
                %s1005 = sphi %s977, %s1076
                %s1006 = sphi %s988, %s1077
              $region67: #{tpu_custom_call.1} parent=63 // loop_header_branch
                %1003 = sbr.rel (%p1000) target = $region71
              $region68: #{tpu_custom_call.1} parent=63 // loop_body
                %v1007 = vld [vmem:[%s1005] sm:$0xff]
                %1008 = vst [vmem:[%s1006] sm:$0xff] %v1007
                %v1009 = vld [vmem:[%s1005 + $0x8] sm:$0xff]
                %1010 = vst [vmem:[%s1006 + $0x8] sm:$0xff] %v1009
                %v1011 = vld [vmem:[%s1005 + $0x10] sm:$0xff]
                %1012 = vst [vmem:[%s1006 + $0x10] sm:$0xff] %v1011
                %v1013 = vld [vmem:[%s1005 + $0x18] sm:$0xff]
                %1014 = vst [vmem:[%s1006 + $0x18] sm:$0xff] %v1013
                %v1015 = vld [vmem:[%s1005 + $0x20] sm:$0xff]
                %1016 = vst [vmem:[%s1006 + $0x20] sm:$0xff] %v1015
                %v1017 = vld [vmem:[%s1005 + $0x28] sm:$0xff]
                %1018 = vst [vmem:[%s1006 + $0x28] sm:$0xff] %v1017
                %v1019 = vld [vmem:[%s1005 + $0x30] sm:$0xff]
                %1020 = vst [vmem:[%s1006 + $0x30] sm:$0xff] %v1019
                %v1021 = vld [vmem:[%s1005 + $0x38] sm:$0xff]
                %1022 = vst [vmem:[%s1006 + $0x38] sm:$0xff] %v1021
                %v1023 = vld [vmem:[%s1005 + $0x40] sm:$0xff]
                %1024 = vst [vmem:[%s1006 + $0x40] sm:$0xff] %v1023
                %v1025 = vld [vmem:[%s1005 + $0x48] sm:$0xff]
                %1026 = vst [vmem:[%s1006 + $0x48] sm:$0xff] %v1025
                %v1027 = vld [vmem:[%s1005 + $0x50] sm:$0xff]
                %1028 = vst [vmem:[%s1006 + $0x50] sm:$0xff] %v1027
                %v1029 = vld [vmem:[%s1005 + $0x58] sm:$0xff]
                %1030 = vst [vmem:[%s1006 + $0x58] sm:$0xff] %v1029
                %v1031 = vld [vmem:[%s1005 + $0x60] sm:$0xff]
                %1032 = vst [vmem:[%s1006 + $0x60] sm:$0xff] %v1031
                %v1033 = vld [vmem:[%s1005 + $0x68] sm:$0xff]
                %1034 = vst [vmem:[%s1006 + $0x68] sm:$0xff] %v1033
                %v1035 = vld [vmem:[%s1005 + $0x70] sm:$0xff]
                %1036 = vst [vmem:[%s1006 + $0x70] sm:$0xff] %v1035
                %v1037 = vld [vmem:[%s1005 + $0x78] sm:$0xff]
                %1038 = vst [vmem:[%s1006 + $0x78] sm:$0xff] %v1037
                %v1039 = vld [vmem:[%s1005 + $0x80] sm:$0xff]
                %1040 = vst [vmem:[%s1006 + $0x80] sm:$0xff] %v1039
                %v1041 = vld [vmem:[%s1005 + $0x88] sm:$0xff]
                %1042 = vst [vmem:[%s1006 + $0x88] sm:$0xff] %v1041
                %v1043 = vld [vmem:[%s1005 + $0x90] sm:$0xff]
                %1044 = vst [vmem:[%s1006 + $0x90] sm:$0xff] %v1043
                %v1045 = vld [vmem:[%s1005 + $0x98] sm:$0xff]
                %1046 = vst [vmem:[%s1006 + $0x98] sm:$0xff] %v1045
                %v1047 = vld [vmem:[%s1005 + $0xa0] sm:$0xff]
                %1048 = vst [vmem:[%s1006 + $0xa0] sm:$0xff] %v1047
                %v1049 = vld [vmem:[%s1005 + $0xa8] sm:$0xff]
                %1050 = vst [vmem:[%s1006 + $0xa8] sm:$0xff] %v1049
                %v1051 = vld [vmem:[%s1005 + $0xb0] sm:$0xff]
                %1052 = vst [vmem:[%s1006 + $0xb0] sm:$0xff] %v1051
                %v1053 = vld [vmem:[%s1005 + $0xb8] sm:$0xff]
                %1054 = vst [vmem:[%s1006 + $0xb8] sm:$0xff] %v1053
                %v1055 = vld [vmem:[%s1005 + $0xc0] sm:$0xff]
                %1056 = vst [vmem:[%s1006 + $0xc0] sm:$0xff] %v1055
                %v1057 = vld [vmem:[%s1005 + $0xc8] sm:$0xff]
                %1058 = vst [vmem:[%s1006 + $0xc8] sm:$0xff] %v1057
                %v1059 = vld [vmem:[%s1005 + $0xd0] sm:$0xff]
                %1060 = vst [vmem:[%s1006 + $0xd0] sm:$0xff] %v1059
                %v1061 = vld [vmem:[%s1005 + $0xd8] sm:$0xff]
                %1062 = vst [vmem:[%s1006 + $0xd8] sm:$0xff] %v1061
                %v1063 = vld [vmem:[%s1005 + $0xe0] sm:$0xff]
                %1064 = vst [vmem:[%s1006 + $0xe0] sm:$0xff] %v1063
                %v1065 = vld [vmem:[%s1005 + $0xe8] sm:$0xff]
                %1066 = vst [vmem:[%s1006 + $0xe8] sm:$0xff] %v1065
                %v1067 = vld [vmem:[%s1005 + $0xf0] sm:$0xff]
                %1068 = vst [vmem:[%s1006 + $0xf0] sm:$0xff] %v1067
                %v1069 = vld [vmem:[%s1005 + $0xf8] sm:$0xff]
                %1070 = vst [vmem:[%s1006 + $0xf8] sm:$0xff] %v1069
                %s1071 = sadd.s32 1, %s1004
                %p1072 = scmp.ge.s32.totalorder %s1071, %s997
                %s1073 = scalar_select %p1072, 0, %s1071
                %s1074 = smul.u32 %s1073, 256
                %s1075 = smul.u32 %s1073, 256
                %s1076 = scalar_lea.vmem %s977, %s1074 [#allocation2]
                %s1077 = scalar_lea.vmem %s988, %s1075
              $region69: #{tpu_custom_call.1} parent=63 // loop_footer
                %s1001 = sadd.s32 %s999, 1
              $region70: #{tpu_custom_call.1} parent=63 // loop_footer_branch
                %998 = sbr.rel target = $region66
              $region71: #{tpu_custom_call.1} parent=63 // loop_exit
                _
              %s1078 = sshrl.u32 %s984, 5
              %s1079 = sand.u32 %s984, 31
              %s1080 = smul.u32 %s1078, 32
              %s1081 = smul.u32 8, %s1080
              %s1082 = scalar_lea.vmem %s977, %s1081 [#allocation2]
              %s1083 = smul.u32 8, %s1080
              %s1084 = scalar_lea.vmem %s988, %s1083
              // While loop
              $region72: #{tpu_custom_call.1} parent=63 // loop_pre_header
                _
              $region73: #{tpu_custom_call.1} parent=63 // loop_header
                %s1086 = sphi 0, %s1088
                %p1087 = scmp.ge.s32.totalorder %s1086, %s1079
                %s1091 = sphi 0, %s1098
                %s1092 = sphi %s1082, %s1101
                %s1093 = sphi %s1084, %s1102
              $region74: #{tpu_custom_call.1} parent=63 // loop_header_branch
                %1090 = sbr.rel (%p1087) target = $region78
              $region75: #{tpu_custom_call.1} parent=63 // loop_body
                %v1094 = vld [vmem:[%s1092] sm:$0xff]
                %1095 = vst [vmem:[%s1093] sm:$0xff] %v1094
                %s1096 = sadd.s32 1, %s1091
                %p1097 = scmp.ge.s32.totalorder %s1096, %s1079
                %s1098 = scalar_select %p1097, 0, %s1096
                %s1099 = smul.u32 %s1098, 8
                %s1100 = smul.u32 %s1098, 8
                %s1101 = scalar_lea.vmem %s1082, %s1099 [#allocation2]
                %s1102 = scalar_lea.vmem %s1084, %s1100
              $region76: #{tpu_custom_call.1} parent=63 // loop_footer
                %s1088 = sadd.s32 %s1086, 1
              $region77: #{tpu_custom_call.1} parent=63 // loop_footer_branch
                %1085 = sbr.rel target = $region73
              $region78: #{tpu_custom_call.1} parent=63 // loop_exit
                _
            $region64: #{tpu_custom_call.1} parent=55 // pred_fallthru
              _
          $region56: #{tpu_custom_call.1} parent=51 // pred_fallthru
            _
          %1213 = vnop
        $region52: #{tpu_custom_call.1} parent=47 // pred_fallthru
          _
      $region48: #{tpu_custom_call.1} parent=5 // pred_fallthru
        _
      %p1214 = scmp.le.s32.totalorder 2, %s13
      // Predicated region
      $region101: #{tpu_custom_call.1} parent=5 // pred_check
        %p1215 = pneg %p1214
      $region102: #{tpu_custom_call.1} parent=5 // pred_check_branch
        %1217 = sbr.rel (%p1215) target = $region104
      $region103: #{tpu_custom_call.1} parent=5 // pred_region
        %s1218 = ssub.s32 %s13, 2
        // Predicated region
        $region105: #{tpu_custom_call.1} parent=103 // pred_check
          %p1219 = pneg %p194
        $region106: #{tpu_custom_call.1} parent=103 // pred_check_branch
          %1221 = sbr.rel (%p1219) target = $region108
        $region107: #{tpu_custom_call.1} parent=103 // pred_region
          %s1222 = sand.u32 %s179, 1
          %s1223 = sand.u32 %s179, 1
          %s1224 = smul.addr %s1223, 256
          %s1225 = scalar_lea.vmem [#allocation2], %s1224
        $region108: #{tpu_custom_call.1} parent=103 // pred_fallthru
          _
      $region104: #{tpu_custom_call.1} parent=5 // pred_fallthru
        _
    $region6: #{tpu_custom_call.1} parent=1 // loop_footer
      %s17 = sadd.s32 1, %s13
    $region7: #{tpu_custom_call.1} parent=1 // loop_footer_branch
      %12 = sbr.rel target = $region3
    $region8: #{tpu_custom_call.1} parent=1 // loop_exit
      _

</llo_original>
